<compile_context>
chip_gen: v5e
topology: v5e:2x2
jax: 0.10.0
libtpu: 0.0.40
codegen_flags: <defaults>
</compile_context>

<pallas_src>
import functools

import jax
import jax.numpy as jnp
from jax.experimental import pallas as pl
from jax.experimental.pallas import tpu as pltpu

_LANE = 128
_MAX_BLOCK_ROWS = 1024      # 1024*128 = 131072 examples / tile
_SUBLANE_ALIGN = 32         # covers f32 (8,128), bf16 (16,128), int8 (32,128)
_PALLAS_MIN_N = 1 << 17     # below this, XLA's fused softmax+gather is as fast


def _round_up(x, m):
    return (x + m - 1) // m * m


def _focal_pow(x, gamma):
    """x**gamma, keeping small integer gamma on the VALU (no exp/log on EUP)."""
    if float(gamma) == int(gamma) and int(gamma) >= 0:
        g = int(gamma)
        if g == 0:
            return jnp.ones_like(x)
        r = x
        for _ in range(g - 1):
            r = r * x
        return r
    return x ** gamma  # non-integer gamma: fall back to pow


def _focal_loss_kernel(logits_ref, targets_ref, sum_ref, cnt_ref, *,
                       gamma, ignore_index, num_classes):
    # targets arrive as int8 (1 B/example of HBM traffic); upcast in-kernel.
    t = targets_ref[...].astype(jnp.int32)                    # (rows, 128)
    # per-class lane-dense slabs; compute in f32 regardless of input dtype
    cls = [logits_ref[c].astype(jnp.float32) for c in range(num_classes)]

    # max over classes (elementwise across the unrolled class slabs)
    m = cls[0]
    for c in range(1, num_classes):
        m = jnp.maximum(m, cls[c])

    shifted = [x - m for x in cls]
    exps = [jnp.exp(x) for x in shifted]
    s = exps[0]
    for c in range(1, num_classes):
        s = s + exps[c]
    log_s = jnp.log(s)                                        # one log / example
    inv_s = pl.reciprocal(s, approx=True)                     # EUP slot, ~free

    # pick the target-class shifted logit / exp with elementwise selects
    sel_shift = shifted[0]
    sel_exp = exps[0]
    for c in range(1, num_classes):
        is_c = t == c
        sel_shift = jnp.where(is_c, shifted[c], sel_shift)
        sel_exp = jnp.where(is_c, exps[c], sel_exp)

    log_p = sel_shift - log_s                                 # log-softmax, no -inf
    p = sel_exp * inv_s
    term = _focal_pow(1.0 - p, gamma) * log_p                 # (rows, 128)

    valid = t != ignore_index                                 # padded rows masked too
    picked = jnp.where(valid, term, 0.0)

    # per-tile, per-lane partial sums -> lane-dense (1, 128) output blocks;
    # the tiny cross-lane/cross-tile reduce happens in plain JAX afterwards.
    sum_ref[0] = jnp.sum(picked, axis=0, keepdims=True)
    cnt_ref[0] = jnp.sum(valid.astype(jnp.float32), axis=0, keepdims=True)


def _focal_loss_pallas(logits_cm, targets, gamma, ignore_index):
    """Pallas path. logits_cm: class-major (C, N) logits. targets: (N,) int."""
    num_classes, n = logits_cm.shape

    block_rows = min(_MAX_BLOCK_ROWS,
                     _round_up(max(1, pl.cdiv(n, _LANE)), _SUBLANE_ALIGN))
    block_elems = block_rows * _LANE
    n_pad = _round_up(n, block_elems)
    grid = n_pad // block_elems
    rows_total = n_pad // _LANE
    pad = n_pad - n

    # (C, N) -> (C, rows, 128): examples dense on (sublane, lane)
    lg_t = jnp.pad(logits_cm, ((0, 0), (0, pad))).reshape(
        num_classes, rows_total, _LANE)

    # int8 targets when representable: 1 B/example instead of 4
    if (-128 <= ignore_index <= 127) and num_classes <= 127:
        tgt_dtype = jnp.int8
    else:
        tgt_dtype = jnp.int32
    t = jnp.pad(targets.astype(tgt_dtype), (0, pad),
                constant_values=ignore_index)                 # padded rows ignored
    t2 = t.reshape(rows_total, _LANE)

    kernel = functools.partial(_focal_loss_kernel, gamma=gamma,
                               ignore_index=ignore_index,
                               num_classes=num_classes)

    sums, counts = pl.pallas_call(
        kernel,
        out_shape=(jax.ShapeDtypeStruct((grid, 1, _LANE), jnp.float32),
                   jax.ShapeDtypeStruct((grid, 1, _LANE), jnp.float32)),
        grid_spec=pltpu.PrefetchScalarGridSpec(
            num_scalar_prefetch=0,
            grid=(grid,),
            in_specs=[
                pl.BlockSpec((num_classes, block_rows, _LANE),
                             lambda i: (0, i, 0)),
                pl.BlockSpec((block_rows, _LANE), lambda i: (i, 0)),
            ],
            out_specs=[
                pl.BlockSpec((1, 1, _LANE), lambda i: (i, 0, 0)),
                pl.BlockSpec((1, 1, _LANE), lambda i: (i, 0, 0)),
            ],
        ),
        compiler_params=pltpu.CompilerParams(
            # independent per-tile partials -> megacore-shardable on v7x
            dimension_semantics=("parallel",),
            # larger double-buffered tiles: raise v5e's 16 MiB default scoped
            # VMEM, stay well inside v7x's 64 MiB physical VMEM.
            vmem_limit_bytes=32 * 1024 * 1024),
    )(lg_t, t2)

    return -(jnp.sum(sums) / jnp.sum(counts))


def _focal_loss_ref(lg, t, gamma, ignore_index):
    """Pure-JAX path (small N / reference)."""
    lg32 = lg.astype(jnp.float32)
    log_p = lg32 - jax.nn.logsumexp(lg32, axis=-1, keepdims=True)
    p = jnp.exp(log_p)
    term = _focal_pow(1.0 - p, gamma) * log_p
    valid = t != ignore_index
    picked = jnp.take_along_axis(term, jnp.clip(t, 0)[:, None], axis=1)[:, 0]
    return -(jnp.sum(jnp.where(valid, picked, 0.0)) /
             jnp.sum(valid.astype(jnp.float32)))


def focal_loss(y_preds, y_true, gamma=2, ignore_index=-100, use_pallas=None):
    """JAX/Pallas equivalent of FocalLoss.forward (weight=None)."""
    # TODO(synk): per-class `weight` argument of nll_loss is not implemented
    # (the module's default weight=None is what is reproduced here).
    logits = y_preds[1]
    num_classes = logits.shape[-1]
    lg = logits.reshape(-1, num_classes)                      # (N, C), keep dtype
    t = y_true.reshape(-1).astype(jnp.int32)
    n = lg.shape[0]

    if use_pallas is None:
        use_pallas = n >= _PALLAS_MIN_N
    if not use_pallas:
        # small N: pad/transpose + pallas_call fixed costs dominate -> plain JAX
        return _focal_loss_ref(lg, t, gamma, ignore_index)

    # TODO(synk): for best end-to-end perf the producer (classifier head) should
    # emit class-major (C, N) logits directly; this transpose materializes one
    # extra HBM copy of the logits before the kernel re-reads them.
    logits_cm = jnp.transpose(lg, (1, 0))                     # (C, N)
    return _focal_loss_pallas(logits_cm, t, gamma, ignore_index)


if __name__ == "__main__":
    key = jax.random.PRNGKey(0)
    k0, k1, k2 = jax.random.split(key, 3)

    B, S, C = 2, 8, 3  # batch, seq, num sentiment classes

    # y_preds is a tuple; only element [1] (the logits) is used by the loss.
    pooled = jax.random.normal(k0, (B, 32), dtype=jnp.float32)        # unused
    logits = jax.random.normal(k1, (B, S, C), dtype=jnp.float32)
    y_true = jax.random.randint(k2, (B, S), 0, C, dtype=jnp.int32)
    # exercise ignore_index masking on one position
    y_true = y_true.at[0, 0].set(-100)

    # force the Pallas path so the kernel is exercised at this small demo size
    loss = focal_loss((pooled, logits), y_true, gamma=2, ignore_index=-100,
                      use_pallas=True)
    jax.block_until_ready(loss)

    # pure-JAX reference check (mirrors the torch module)
    lg = logits.reshape(-1, C)
    p = jax.nn.softmax(lg, axis=-1)
    term = (1.0 - p) ** 2 * jnp.log(p)
    t = y_true.reshape(-1)
    valid = t != -100
    picked = jnp.take_along_axis(term, jnp.clip(t, 0)[:, None], axis=1)[:, 0]
    ref = -jnp.sum(jnp.where(valid, picked, 0.0)) / jnp.sum(valid)

    # tolerance covers the EUP approximate reciprocal used for p inside kernel
    assert jnp.allclose(loss, ref, atol=2e-3, rtol=2e-3), (loss, ref)

    print("KERNEL_OK")
</pallas_src>

<mosaic_0001>
module attributes {stable_mosaic.version = 11 : i64} {
  func.func @_focal_loss_kernel(%arg0: i32, %arg1: memref<3x32x128xf32, #tpu.memory_space<vmem>>, %arg2: memref<32x128xi8, #tpu.memory_space<vmem>>, %arg3: memref<1x1x128xf32, #tpu.memory_space<vmem>>, %arg4: memref<1x1x128xf32, #tpu.memory_space<vmem>>) attributes {dimension_semantics = [#tpu.dimension_semantics<parallel>], iteration_bounds = array<i64: 1>, scalar_prefetch = 0 : i64, scratch_operands = 0 : i64, tpu.core_type = #tpu.core_type<tc>, window_params = [{transform_indices = @transform_0, window_bounds = array<i64: 3, 32, 128>}, {transform_indices = @transform_1, window_bounds = array<i64: 32, 128>}, {transform_indices = @transform_2, window_bounds = array<i64: 1, 1, 128>}, {transform_indices = @transform_3, window_bounds = array<i64: 1, 1, 128>}]} {
    %c0 = arith.constant 0 : index
    %c0_0 = arith.constant 0 : index
    %0 = vector.load %arg2[%c0, %c0_0] : memref<32x128xi8, #tpu.memory_space<vmem>>, vector<32x128xi8>
    %1 = arith.extsi %0 : vector<32x128xi8> to vector<32x128xi32>
    %c0_1 = arith.constant 0 : index
    %c0_2 = arith.constant 0 : index
    %c0_3 = arith.constant 0 : index
    %2 = vector.load %arg1[%c0_1, %c0_2, %c0_3] : memref<3x32x128xf32, #tpu.memory_space<vmem>>, vector<1x32x128xf32>
    %3 = vector.shape_cast %2 : vector<1x32x128xf32> to vector<32x128xf32>
    %c1 = arith.constant 1 : index
    %c0_4 = arith.constant 0 : index
    %c0_5 = arith.constant 0 : index
    %4 = vector.load %arg1[%c1, %c0_4, %c0_5] : memref<3x32x128xf32, #tpu.memory_space<vmem>>, vector<1x32x128xf32>
    %5 = vector.shape_cast %4 : vector<1x32x128xf32> to vector<32x128xf32>
    %c2 = arith.constant 2 : index
    %c0_6 = arith.constant 0 : index
    %c0_7 = arith.constant 0 : index
    %6 = vector.load %arg1[%c2, %c0_6, %c0_7] : memref<3x32x128xf32, #tpu.memory_space<vmem>>, vector<1x32x128xf32>
    %7 = vector.shape_cast %6 : vector<1x32x128xf32> to vector<32x128xf32>
    %8 = arith.maximumf %3, %5 : vector<32x128xf32>
    %9 = arith.maximumf %8, %7 : vector<32x128xf32>
    %10 = arith.subf %3, %9 : vector<32x128xf32>
    %11 = arith.subf %5, %9 : vector<32x128xf32>
    %12 = arith.subf %7, %9 : vector<32x128xf32>
    %13 = math.exp %10 : vector<32x128xf32>
    %14 = math.exp %11 : vector<32x128xf32>
    %15 = math.exp %12 : vector<32x128xf32>
    %16 = arith.addf %13, %14 : vector<32x128xf32>
    %17 = arith.addf %16, %15 : vector<32x128xf32>
    %18 = math.log %17 : vector<32x128xf32>
    %19 = tpu.reciprocal %17 {approx = true} : vector<32x128xf32> -> vector<32x128xf32>
    %c1_i32 = arith.constant 1 : i32
    %20 = vector.broadcast %c1_i32 : i32 to vector<32x128xi32>
    %21 = arith.cmpi eq, %1, %20 : vector<32x128xi32>
    %22 = arith.select %21, %11, %10 : vector<32x128xi1>, vector<32x128xf32>
    %23 = arith.select %21, %14, %13 : vector<32x128xi1>, vector<32x128xf32>
    %c2_i32 = arith.constant 2 : i32
    %24 = vector.broadcast %c2_i32 : i32 to vector<32x128xi32>
    %25 = arith.cmpi eq, %1, %24 : vector<32x128xi32>
    %26 = arith.select %25, %12, %22 : vector<32x128xi1>, vector<32x128xf32>
    %27 = arith.select %25, %15, %23 : vector<32x128xi1>, vector<32x128xf32>
    %28 = arith.subf %26, %18 : vector<32x128xf32>
    %29 = arith.mulf %27, %19 : vector<32x128xf32>
    %cst = arith.constant 1.000000e+00 : f32
    %30 = vector.broadcast %cst : f32 to vector<32x128xf32>
    %31 = arith.subf %30, %29 : vector<32x128xf32>
    %32 = arith.mulf %31, %31 : vector<32x128xf32>
    %33 = arith.mulf %32, %28 : vector<32x128xf32>
    %c-100_i32 = arith.constant -100 : i32
    %34 = vector.broadcast %c-100_i32 : i32 to vector<32x128xi32>
    %35 = arith.cmpi ne, %1, %34 : vector<32x128xi32>
    %cst_8 = arith.constant 0.000000e+00 : f32
    %36 = vector.broadcast %cst_8 : f32 to vector<32x128xf32>
    %37 = arith.select %35, %33, %36 : vector<32x128xi1>, vector<32x128xf32>
    %cst_9 = arith.constant dense<0.000000e+00> : vector<128xf32>
    %38 = vector.multi_reduction <add>, %37, %cst_9 [0] : vector<32x128xf32> to vector<128xf32>
    %39 = vector.shape_cast %38 : vector<128xf32> to vector<1x128xf32>
    %c0_10 = arith.constant 0 : index
    %c0_11 = arith.constant 0 : index
    %c0_12 = arith.constant 0 : index
    %40 = vector.load %arg3[%c0_10, %c0_11, %c0_12] : memref<1x1x128xf32, #tpu.memory_space<vmem>>, vector<1x1x128xf32>
    %41 = vector.shape_cast %40 : vector<1x1x128xf32> to vector<1x128xf32>
    %42 = vector.shape_cast %39 : vector<1x128xf32> to vector<1x1x128xf32>
    tpu.vector_store %arg3[%c0_10, %c0_11, %c0_12], %42 {strides = array<i32>} : memref<1x1x128xf32, #tpu.memory_space<vmem>>, vector<1x1x128xf32>,
    %43 = arith.extui %35 : vector<32x128xi1> to vector<32x128xi32>
    %44 = arith.sitofp %43 : vector<32x128xi32> to vector<32x128xf32>
    %cst_13 = arith.constant dense<0.000000e+00> : vector<128xf32>
    %45 = vector.multi_reduction <add>, %44, %cst_13 [0] : vector<32x128xf32> to vector<128xf32>
    %46 = vector.shape_cast %45 : vector<128xf32> to vector<1x128xf32>
    %c0_14 = arith.constant 0 : index
    %c0_15 = arith.constant 0 : index
    %c0_16 = arith.constant 0 : index
    %47 = vector.load %arg4[%c0_14, %c0_15, %c0_16] : memref<1x1x128xf32, #tpu.memory_space<vmem>>, vector<1x1x128xf32>
    %48 = vector.shape_cast %47 : vector<1x1x128xf32> to vector<1x128xf32>
    %49 = vector.shape_cast %46 : vector<1x128xf32> to vector<1x1x128xf32>
    tpu.vector_store %arg4[%c0_14, %c0_15, %c0_16], %49 {strides = array<i32>} : memref<1x1x128xf32, #tpu.memory_space<vmem>>, vector<1x1x128xf32>,
    return
  }
  func.func @transform_0(%arg0: i32) -> (i32, i32, i32) {
    %c0_i32 = arith.constant 0 : i32
    %c0_i32_0 = arith.constant 0 : i32
    %c0_i32_1 = arith.constant 0 : i32
    return %c0_i32, %arg0, %c0_i32_0 : i32, i32, i32
  }
  func.func @transform_1(%arg0: i32) -> (i32, i32) {
    %c0_i32 = arith.constant 0 : i32
    %c0_i32_0 = arith.constant 0 : i32
    return %arg0, %c0_i32 : i32, i32
  }
  func.func @transform_2(%arg0: i32) -> (i32, i32, i32) {
    %c0_i32 = arith.constant 0 : i32
    %c0_i32_0 = arith.constant 0 : i32
    %c0_i32_1 = arith.constant 0 : i32
    return %arg0, %c0_i32, %c0_i32_0 : i32, i32, i32
  }
  func.func @transform_3(%arg0: i32) -> (i32, i32, i32) {
    %c0_i32 = arith.constant 0 : i32
    %c0_i32_0 = arith.constant 0 : i32
    %c0_i32_1 = arith.constant 0 : i32
    return %arg0, %c0_i32, %c0_i32_0 : i32, i32, i32
  }
}

</mosaic_0001>

<llo_original>
// kernel: tpu_custom_call.1
$region0: #{tpu_custom_call.1}
  #allocation0 [shape = 'u32[]', space=smem, size = 0x4, offset = 0x4, fixed_abs, tag = 'smem constant byte address 0x4 - core index']
  #allocation1 [shape = 'u32[72,128]{1,0:T(1,128)}', space=vmem, size = 0x9000, scoped, tag = 'internal scratch']
  %s0 = inlined_call_operand.hbm [shape: f32[3,32,128], index: 0, kind: input, shape index: {}]
  %s1 = inlined_call_operand.hbm [shape: s8[32,128], index: 1, kind: input, shape index: {}]
  %s2 = inlined_call_operand.hbm [shape: f32[1,1,128], index: 2, kind: output, shape index: {0}]
  %s3 = inlined_call_operand.hbm [shape: f32[1,1,128], index: 3, kind: output, shape index: {1}]
  %4 = xla_tuple %s2, %s3
  %s5 = sld [smem:[#allocation0]]
  $region34: #{tpu_custom_call.1} parent=0
    _
  %s7 = ssub.s32 1, %s5
  %s8 = scalar_select 0, %s7, %s5
  $region1: #{tpu_custom_call.1} parent=0
    #allocation2 [shape = 'u8[49152]{0}', space=vmem, size = 0xc000, scoped, tag = 'input window, operand 0, single buffered']
    #allocation3 [shape = 's32[1]{0}', space=sflag, size = 0x4, scoped, tag = 'scoped memory for tpu_custom_call.1']
    #allocation4 [shape = 's32[1]{0}', space=sflag, size = 0x4, scoped, tag = 'scoped memory for tpu_custom_call.1']
    #allocation5 [shape = 'u8[4096]{0}', space=vmem, size = 0x1000, scoped, tag = 'input window, operand 1, single buffered']
    #allocation6 [shape = 's32[1]{0}', space=sflag, size = 0x4, scoped, tag = 'scoped memory for tpu_custom_call.1']
    #allocation7 [shape = 'u8[512]{0}', space=vmem, size = 0x400, scoped, tag = 'output window, operand 0, single buffered']
    #allocation8 [shape = 'u8[512]{0}', space=vmem, size = 0x400, scoped, tag = 'output window, operand 1, single buffered']
    #allocation9 [shape = 's32[1]{0}', space=sflag, size = 0x4, scoped, tag = 'scoped memory for tpu_custom_call.1']
    %9 = vsyncpa [#allocation3], 0
    %10 = vsyncpa [#allocation6], 0
    %11 = vsyncpa [#allocation4], 0
    %12 = vsyncpa [#allocation9], 0
    // Predicated region
    $region2: #{tpu_custom_call.1} parent=1 // pred_check
      _
    $region3: #{tpu_custom_call.1} parent=1 // pred_check_branch
      %14 = sbr.rel (0) target = $region5
    $region4: #{tpu_custom_call.1} parent=1 // pred_region
      %16 = vsyncadd [#allocation3], 0
      %s17 = sshll.u32 %s0, 4
      %s18 = int_to_ptr.hbm [resolvable:$true] %s17
      %s19 = sshll.u32 [#allocation2], 4
      %s20 = int_to_ptr.vmem [resolvable:$true] %s19
      %25 = dma.hbm_to_vmem [thread:$0]  %s18, 1536, %s20, [#allocation3], 128, 128, 8
    $region5: #{tpu_custom_call.1} parent=1 // pred_fallthru
      _
    // Predicated region
    $region6: #{tpu_custom_call.1} parent=1 // pred_check
      _
    $region7: #{tpu_custom_call.1} parent=1 // pred_check_branch
      %27 = sbr.rel (0) target = $region9
    $region8: #{tpu_custom_call.1} parent=1 // pred_region
      %29 = vsyncadd [#allocation6], 0
      %s31 = sshll.u32 %s1, 4
      %s32 = int_to_ptr.hbm [resolvable:$true] %s31
      %s33 = sshll.u32 [#allocation5], 4
      %s34 = int_to_ptr.vmem [resolvable:$true] %s33
      %36 = dma.hbm_to_vmem [thread:$0]  %s32, 128, %s34, [#allocation6]
    $region9: #{tpu_custom_call.1} parent=1 // pred_fallthru
      _
    // Predicated region
    $region10: #{tpu_custom_call.1} parent=1 // pred_check
      _
    $region11: #{tpu_custom_call.1} parent=1 // pred_check_branch
      %38 = sbr.rel (0) target = $region13
    $region12: #{tpu_custom_call.1} parent=1 // pred_region
      %40 = dma.done [#allocation3], 1536
    $region13: #{tpu_custom_call.1} parent=1 // pred_fallthru
      _
    // Predicated region
    $region14: #{tpu_custom_call.1} parent=1 // pred_check
      _
    $region15: #{tpu_custom_call.1} parent=1 // pred_check_branch
      %42 = sbr.rel (0) target = $region17
    $region16: #{tpu_custom_call.1} parent=1 // pred_region
      %44 = dma.done [#allocation6], 128
    $region17: #{tpu_custom_call.1} parent=1 // pred_fallthru
      _
    %v45 = vld [vmem:[#allocation5] sm:$0xff]
    %v46 = vunpack.c.0.s8 %v45
    %v47 = vunpack.c.1.s8 %v45
    %v48 = vunpack.c.2.s8 %v45
    %v49 = vunpack.c.3.s8 %v45
    %v50 = vld [vmem:[#allocation2] sm:$0xff]
    %v51 = vld [vmem:[#allocation2 + $0x8] sm:$0xff]
    %v52 = vld [vmem:[#allocation2 + $0x10] sm:$0xff]
    %v53 = vld [vmem:[#allocation2 + $0x18] sm:$0xff]
    %s54 = scalar_lea.vmem [#allocation2], 32
    %v55 = vld [vmem:[%s54] sm:$0xff]
    %v56 = vld [vmem:[%s54 + $0x8] sm:$0xff]
    %v57 = vld [vmem:[%s54 + $0x10] sm:$0xff]
    %v58 = vld [vmem:[%s54 + $0x18] sm:$0xff]
    %s59 = scalar_lea.vmem [#allocation2], 64
    %v60 = vld [vmem:[%s59] sm:$0xff]
    %v61 = vld [vmem:[%s59 + $0x8] sm:$0xff]
    %v62 = vld [vmem:[%s59 + $0x10] sm:$0xff]
    %v63 = vld [vmem:[%s59 + $0x18] sm:$0xff]
    %v64 = vmax.f32 %v50, %v55
    %v65 = vmax.f32 %v51, %v56
    %v66 = vmax.f32 %v52, %v57
    %v67 = vmax.f32 %v53, %v58
    %v68 = vmax.f32 %v64, %v60
    %v69 = vmax.f32 %v65, %v61
    %v70 = vmax.f32 %v66, %v62
    %v71 = vmax.f32 %v67, %v63
    %v72 = vsub.f32 %v50, %v68
    %v73 = vsub.f32 %v51, %v69
    %v74 = vsub.f32 %v52, %v70
    %v75 = vsub.f32 %v53, %v71
    %v76 = vsub.f32 %v55, %v68
    %v77 = vsub.f32 %v56, %v69
    %v78 = vsub.f32 %v57, %v70
    %v79 = vsub.f32 %v58, %v71
    %v80 = vsub.f32 %v60, %v68
    %v81 = vsub.f32 %v61, %v69
    %v82 = vsub.f32 %v62, %v70
    %v83 = vsub.f32 %v63, %v71
    %v84 = vmul.f32 %v72, 1.442695
    %v85 = vpow.pop %v84
    %v86 = vmul.f32 %v73, 1.442695
    %v87 = vpow.pop %v86
    %v88 = vmul.f32 %v74, 1.442695
    %v89 = vpow.pop %v88
    %v90 = vmul.f32 %v75, 1.442695
    %v91 = vpow.pop %v90
    %v92 = vmul.f32 %v76, 1.442695
    %v93 = vpow.pop %v92
    %v94 = vmul.f32 %v77, 1.442695
    %v95 = vpow.pop %v94
    %v96 = vmul.f32 %v78, 1.442695
    %v97 = vpow.pop %v96
    %v98 = vmul.f32 %v79, 1.442695
    %v99 = vpow.pop %v98
    %v100 = vmul.f32 %v80, 1.442695
    %v101 = vpow.pop %v100
    %v102 = vmul.f32 %v81, 1.442695
    %v103 = vpow.pop %v102
    %v104 = vmul.f32 %v82, 1.442695
    %v105 = vpow.pop %v104
    %v106 = vmul.f32 %v83, 1.442695
    %v107 = vpow.pop %v106
    %v108 = vadd.f32 %v85, %v93
    %v109 = vadd.f32 %v87, %v95
    %v110 = vadd.f32 %v89, %v97
    %v111 = vadd.f32 %v91, %v99
    %v112 = vadd.f32 %v108, %v101
    %v113 = vadd.f32 %v109, %v103
    %v114 = vadd.f32 %v110, %v105
    %v115 = vadd.f32 %v111, %v107
    %v116 = vlog2.pop %v112
    %v117 = vmul.f32 %v116, 0.6931472
    %v118 = vlog2.pop %v113
    %v119 = vmul.f32 %v118, 0.6931472
    %v120 = vlog2.pop %v114
    %v121 = vmul.f32 %v120, 0.6931472
    %v122 = vlog2.pop %v115
    %v123 = vmul.f32 %v122, 0.6931472
    %v124 = vrcp.pop %v112
    %v125 = vrcp.pop %v113
    %v126 = vrcp.pop %v114
    %v127 = vrcp.pop %v115
    %vm128 = vcmp.eq.s32.totalorder %v46, 1
    %vm129 = vcmp.eq.s32.totalorder %v47, 1
    %vm130 = vcmp.eq.s32.totalorder %v48, 1
    %vm131 = vcmp.eq.s32.totalorder %v49, 1
    %v132 = vsel %vm128, %v76, %v72
    %v133 = vsel %vm129, %v77, %v73
    %v134 = vsel %vm130, %v78, %v74
    %v135 = vsel %vm131, %v79, %v75
    %v136 = vsel %vm128, %v93, %v85
    %v137 = vsel %vm129, %v95, %v87
    %v138 = vsel %vm130, %v97, %v89
    %v139 = vsel %vm131, %v99, %v91
    %vm140 = vcmp.eq.s32.totalorder %v46, 2
    %vm141 = vcmp.eq.s32.totalorder %v47, 2
    %vm142 = vcmp.eq.s32.totalorder %v48, 2
    %vm143 = vcmp.eq.s32.totalorder %v49, 2
    %v144 = vsel %vm140, %v80, %v132
    %v145 = vsel %vm141, %v81, %v133
    %v146 = vsel %vm142, %v82, %v134
    %v147 = vsel %vm143, %v83, %v135
    %v148 = vsel %vm140, %v101, %v136
    %v149 = vsel %vm141, %v103, %v137
    %v150 = vsel %vm142, %v105, %v138
    %v151 = vsel %vm143, %v107, %v139
    %v152 = vsub.f32 %v144, %v117
    %v153 = vsub.f32 %v145, %v119
    %v154 = vsub.f32 %v146, %v121
    %v155 = vsub.f32 %v147, %v123
    %v156 = vmul.f32 %v148, %v124
    %v157 = vmul.f32 %v149, %v125
    %v158 = vmul.f32 %v150, %v126
    %v159 = vmul.f32 %v151, %v127
    %v160 = vsub.f32 1.0, %v156
    %v161 = vsub.f32 1.0, %v157
    %v162 = vsub.f32 1.0, %v158
    %v163 = vsub.f32 1.0, %v159
    %v164 = vmul.f32 %v160, %v160
    %v165 = vmul.f32 %v161, %v161
    %v166 = vmul.f32 %v162, %v162
    %v167 = vmul.f32 %v163, %v163
    %v168 = vmul.f32 %v164, %v152
    %v169 = vmul.f32 %v165, %v153
    %v170 = vmul.f32 %v166, %v154
    %v171 = vmul.f32 %v167, %v155
    %vm172 = vcmp.ne.s32.totalorder %v46, 4294967196
    %vm173 = vcmp.ne.s32.totalorder %v47, 4294967196
    %vm174 = vcmp.ne.s32.totalorder %v48, 4294967196
    %vm175 = vcmp.ne.s32.totalorder %v49, 4294967196
    %v176 = vsel %vm172, %v168, 0.0
    %v177 = vsel %vm173, %v169, 0.0
    %v178 = vsel %vm174, %v170, 0.0
    %v179 = vsel %vm175, %v171, 0.0
    %v180 = vadd.f32 %v176, %v177
    %v181 = vadd.f32 %v180, %v178
    %v182 = vadd.f32 %v181, %v179
    %v183 = vrot.slane %v182, 4
    %v184 = vadd.f32 %v182, %v183
    %v185 = vrot.slane %v184, 2
    %v186 = vadd.f32 %v184, %v185
    %v187 = vrot.slane %v186, 1
    %v188 = vadd.f32 %v186, %v187
    %189 = vst [vmem:[#allocation7] sm:$0x1] %v188
    %v190 = vsel %vm172, 1, 0
    %v191 = vsel %vm173, 1, 0
    %v192 = vsel %vm174, 1, 0
    %v193 = vsel %vm175, 1, 0
    %v194 = vcvt.s32.f32 %v190
    %v195 = vcvt.s32.f32 %v191
    %v196 = vcvt.s32.f32 %v192
    %v197 = vcvt.s32.f32 %v193
    %v198 = vadd.f32 %v194, %v195
    %v199 = vadd.f32 %v198, %v196
    %v200 = vadd.f32 %v199, %v197
    %v201 = vrot.slane %v200, 4
    %v202 = vadd.f32 %v200, %v201
    %v203 = vrot.slane %v202, 2
    %v204 = vadd.f32 %v202, %v203
    %v205 = vrot.slane %v204, 1
    %v206 = vadd.f32 %v204, %v205
    %207 = vst [vmem:[#allocation8] sm:$0x1] %v206
    // Predicated region
    $region18: #{tpu_custom_call.1} parent=1 // pred_check
      _
    $region19: #{tpu_custom_call.1} parent=1 // pred_check_branch
      %209 = sbr.rel (0) target = $region21
    $region20: #{tpu_custom_call.1} parent=1 // pred_region
      %211 = vsyncadd [#allocation4], 0
      %s213 = sshll.u32 [#allocation7], 4
      %s214 = int_to_ptr.vmem [resolvable:$true] %s213
      %s215 = sshll.u32 %s2, 4
      %s216 = int_to_ptr.hbm [resolvable:$true] %s215
      %218 = dma.vmem_to_hbm [thread:$0]  %s214, 16, %s216, [#allocation4]
    $region21: #{tpu_custom_call.1} parent=1 // pred_fallthru
      _
    // Predicated region
    $region22: #{tpu_custom_call.1} parent=1 // pred_check
      _
    $region23: #{tpu_custom_call.1} parent=1 // pred_check_branch
      %220 = sbr.rel (0) target = $region25
    $region24: #{tpu_custom_call.1} parent=1 // pred_region
      %222 = vsyncadd [#allocation9], 0
      %s224 = sshll.u32 [#allocation8], 4
      %s225 = int_to_ptr.vmem [resolvable:$true] %s224
      %s226 = sshll.u32 %s3, 4
      %s227 = int_to_ptr.hbm [resolvable:$true] %s226
      %229 = dma.vmem_to_hbm [thread:$0]  %s225, 16, %s227, [#allocation9]
    $region25: #{tpu_custom_call.1} parent=1 // pred_fallthru
      _
    // Predicated region
    $region26: #{tpu_custom_call.1} parent=1 // pred_check
      _
    $region27: #{tpu_custom_call.1} parent=1 // pred_check_branch
      %231 = sbr.rel (0) target = $region29
    $region28: #{tpu_custom_call.1} parent=1 // pred_region
      %233 = dma.done [#allocation4], 16
    $region29: #{tpu_custom_call.1} parent=1 // pred_fallthru
      _
    // Predicated region
    $region30: #{tpu_custom_call.1} parent=1 // pred_check
      _
    $region31: #{tpu_custom_call.1} parent=1 // pred_check_branch
      %235 = sbr.rel (0) target = $region33
    $region32: #{tpu_custom_call.1} parent=1 // pred_region
      %237 = dma.done [#allocation9], 16
    $region33: #{tpu_custom_call.1} parent=1 // pred_fallthru
      _
    %238 = vsyncpa [#allocation3], 1
    %239 = vsyncpa [#allocation6], 1
    %240 = vsyncpa [#allocation4], 1
    %241 = vsyncpa [#allocation9], 1

</llo_original>
